<compile_context>
chip_gen: v6e
topology: v6e:2x2x1
jax: 0.10.0
libtpu: 0.0.40
codegen_flags: <defaults>
</compile_context>

<pallas_src>
import functools

import jax
import jax.numpy as jnp
from jax.experimental import pallas as pl
from jax.experimental.pallas import tpu as pltpu


def _round_up(v, m):
    return (v + m - 1) // m * m


def _conv_bn_silu_kernel(x_ref, w_ref, shift_ref, o_ref, *,
                         ksize, stride, tile_l, halo, act):
    """One (sample, L-tile) grid step.

    x_ref:     (1, stride, C_in_pad, L_phase)  phase-de-interleaved, pre-padded
    w_ref:     (K, C_out_pad, C_in_pad)        conv weight, BN scale folded in
    shift_ref: (C_out_pad, 1)                  folded BN shift (f32)
    o_ref:     (1, C_out_pad, TILE_L)          lane-dense output tile
    """
    j = pl.program_id(1)
    start = pl.multiple_of(j * tile_l, 128)          # 128-aligned lane offset
    c_out_pad = o_ref.shape[1]

    acc = jnp.zeros((c_out_pad, tile_l), jnp.float32)
    # K accumulating MXU dots reading shifted windows off the resident ref.
    for r in range(min(stride, ksize)):              # static: phases (<= stride)
        # One aligned dynamic window per phase covering all of its taps.
        xw = x_ref[0, r, :, pl.ds(start, tile_l + halo)]   # (C_in_pad, TILE_L+halo)
        for k in range(r, ksize, stride):            # static: taps of this phase
            q = k // stride                          # static column offset
            xk = xw[:, q:q + tile_l]                 # static lane shift
            acc = acc + jnp.dot(w_ref[k], xk,
                                preferred_element_type=jnp.float32)

    y = acc + shift_ref[...]                         # eval-mode BN shift
    if act:                                          # SiLU: y * sigmoid(y)
        y = y * pl.reciprocal(1.0 + jnp.exp(-y), approx=True)
    # Dropout(p=0.2): identity in eval mode.
    o_ref[0] = y.astype(o_ref.dtype)


def conv_forward(x, w, gamma, beta, running_mean, running_var, *,
                 stride=1, padding=0, eps=1e-5, act=True,
                 compute_dtype=jnp.bfloat16, out_dtype=None, tile_l=None):
    """Fused Conv1d(bias=False) + BatchNorm1d(eval) + SiLU + Dropout(eval)."""
    n, c_in, l = x.shape
    c_out, c_in_w, ks = w.shape
    assert c_in_w == c_in
    assert l + 2 * padding >= ks
    l_out = (l + 2 * padding - ks) // stride + 1
    out_dtype = x.dtype if out_dtype is None else out_dtype

    # ---- fold eval-mode BN into the conv:  y = s * (W (*) x) + b -------------
    inv_std = jax.lax.rsqrt(running_var.astype(jnp.float32) + eps)
    scale = gamma.astype(jnp.float32) * inv_std
    shift = beta.astype(jnp.float32) - running_mean.astype(jnp.float32) * scale

    # ---- (8,128)/(16,128) alignment ------------------------------------------
    pack = 16 if jnp.dtype(compute_dtype).itemsize == 2 else 8
    c_in_pad = _round_up(c_in, pack)
    c_out_pad = _round_up(c_out, pack)
    if tile_l is None:
        tile_l = min(512, _round_up(l_out, 128))     # 512-lane tiles, 128-aligned
    tile_l = _round_up(tile_l, 128)
    n_l_tiles = pl.cdiv(l_out, tile_l)
    l_out_pad = n_l_tiles * tile_l
    halo = 128 if (ks - 1) // stride > 0 else 0      # extra aligned window cols
    l_phase = l_out_pad + halo                       # per-phase columns (128-mult)
    l_total = l_phase * stride                       # padded input length

    # ---- weight: (C_out, C_in, K) -> (K, C_out_pad, C_in_pad), scale folded --
    w_scaled = w.astype(jnp.float32) * scale[:, None, None]
    w_k = jnp.transpose(w_scaled, (2, 0, 1))
    w_k = jnp.pad(w_k, ((0, 0), (0, c_out_pad - c_out), (0, c_in_pad - c_in)))
    w_k = w_k.astype(compute_dtype)
    shift_p = jnp.pad(shift, (0, c_out_pad - c_out)).reshape(c_out_pad, 1)

    # ---- input: conv zero-halo + right pad + phase de-interleave -------------
    # Padding once here removes all in-kernel concatenation; the de-interleave
    # (position p = q*stride + r -> [r, q]) removes strided lane slices for the
    # stride-2 downsample convs.
    right_pad = l_total - (l + padding)
    assert right_pad >= 0
    xp = jnp.pad(x.astype(compute_dtype),
                 ((0, 0), (0, c_in_pad - c_in), (padding, right_pad)))
    xp = xp.reshape(n, c_in_pad, l_phase, stride)
    xp = jnp.transpose(xp, (0, 3, 1, 2))             # (N, stride, C_in_pad, L_phase)

    kernel = functools.partial(_conv_bn_silu_kernel, ksize=ks, stride=stride,
                               tile_l=tile_l, halo=halo, act=act)

    itemsize = jnp.dtype(compute_dtype).itemsize
    out_itemsize = jnp.dtype(out_dtype).itemsize
    cost = pl.CostEstimate(
        flops=2 * n * c_out * c_in * ks * l_out,
        transcendentals=(n * c_out * l_out) if act else 0,
        bytes_accessed=(n * stride * c_in_pad * l_phase
                        + ks * c_out_pad * c_in_pad) * itemsize
        + n * c_out_pad * l_out_pad * out_itemsize + c_out_pad * 4,
    )

    # VMEM: double-buffered input row + output tile + weights + f32 accumulator.
    vmem_needed = (2 * stride * c_in_pad * l_phase * itemsize
                   + 2 * c_out_pad * tile_l * out_itemsize
                   + 2 * ks * c_out_pad * c_in_pad * itemsize
                   + c_out_pad * tile_l * 4
                   + (4 << 20))
    vmem_limit = int(min(max(vmem_needed, 16 << 20), 48 << 20))

    out = pl.pallas_call(
        kernel,
        out_shape=jax.ShapeDtypeStruct((n, c_out_pad, l_out_pad), out_dtype),
        grid=(n, n_l_tiles),
        in_specs=[
            # Whole padded row per sample; the block index is constant along the
            # inner L axis, so it is DMA'd once per sample and stays resident.
            pl.BlockSpec((1, stride, c_in_pad, l_phase),
                         lambda nn, jj: (nn, 0, 0, 0)),
            pl.BlockSpec((ks, c_out_pad, c_in_pad), lambda nn, jj: (0, 0, 0)),
            pl.BlockSpec((c_out_pad, 1), lambda nn, jj: (0, 0)),
        ],
        out_specs=pl.BlockSpec((1, c_out_pad, tile_l),
                               lambda nn, jj: (nn, 0, jj)),
        compiler_params=pltpu.CompilerParams(
            dimension_semantics=("parallel", "parallel"),
            vmem_limit_bytes=vmem_limit),
        cost_estimate=cost,
    )(xp, w_k, shift_p)

    # Strip alignment padding back to PyTorch NCW.
    return out[:, :c_out, :l_out]


def _reference(x, w, gamma, beta, running_mean, running_var,
               *, stride, padding, eps=1e-5, act=True):
    conv = jax.lax.conv_general_dilated(
        x.astype(jnp.float32), w.astype(jnp.float32),
        window_strides=(stride,), padding=[(padding, padding)],
        dimension_numbers=('NCH', 'OIH', 'NCH'))
    y = (conv - running_mean[None, :, None]) \
        * (gamma / jnp.sqrt(running_var + eps))[None, :, None] \
        + beta[None, :, None]
    if act:
        y = y * jax.nn.sigmoid(y)
    return y


if __name__ == "__main__":
    key = jax.random.PRNGKey(0)

    # Small configs covering the Conv variants inside Neck:
    #   default 3x conv (pad 1), SPPF conv (k=5, p=2), C2F/Bottleneck pointwise
    #   (k=1), and the stride-2 downsample convs (k=3, s=2, p=1).
    configs = [
        # (N, C_in, L, C_out, K, stride, pad, act)
        (2, 4, 16, 8, 3, 1, 1, True),
        (2, 8, 16, 8, 5, 1, 2, True),
        (2, 8, 16, 4, 1, 1, 0, True),
        (2, 8, 16, 8, 3, 2, 1, True),
    ]

    for idx, (n, c_in, l, c_out, ks, s, p, act) in enumerate(configs):
        key, kx, kw, kg, kb, km, kv = jax.random.split(key, 7)
        x = jax.random.normal(kx, (n, c_in, l), dtype=jnp.float32)
        w = jax.random.normal(kw, (c_out, c_in, ks), dtype=jnp.float32) * 0.1
        gamma = 1.0 + 0.1 * jax.random.normal(kg, (c_out,), dtype=jnp.float32)
        beta = 0.1 * jax.random.normal(kb, (c_out,), dtype=jnp.float32)
        rmean = 0.1 * jax.random.normal(km, (c_out,), dtype=jnp.float32)
        rvar = 1.0 + 0.1 * jax.random.uniform(kv, (c_out,), dtype=jnp.float32)

        out = conv_forward(x, w, gamma, beta, rmean, rvar,
                           stride=s, padding=p, act=act)
        out = jax.block_until_ready(out)

        ref = _reference(x, w, gamma, beta, rmean, rvar,
                         stride=s, padding=p, act=act)
        l_out = (l + 2 * p - ks) // s + 1
        assert out.shape == (n, c_out, l_out), (idx, out.shape)
        # bf16 MXU operands + approx reciprocal vs f32 reference.
        assert jnp.allclose(out, ref, atol=5e-2, rtol=5e-2), (
            idx, float(jnp.max(jnp.abs(out - ref))))

    print("KERNEL_OK")
</pallas_src>

<mosaic_0001>
module attributes {stable_mosaic.version = 11 : i64} {
  func.func @_conv_bn_silu_kernel(%arg0: i32, %arg1: i32, %arg2: memref<1x1x16x256xbf16, #tpu.memory_space<vmem>>, %arg3: memref<3x16x16xbf16, #tpu.memory_space<vmem>>, %arg4: memref<16x1xf32, #tpu.memory_space<vmem>>, %arg5: memref<1x16x128xf32, #tpu.memory_space<vmem>>) attributes {dimension_semantics = [#tpu.dimension_semantics<parallel>, #tpu.dimension_semantics<parallel>], iteration_bounds = array<i64: 2, 1>, scalar_prefetch = 0 : i64, scratch_operands = 0 : i64, tpu.core_type = #tpu.core_type<tc>, window_params = [{transform_indices = @transform_0, window_bounds = array<i64: 1, 1, 16, 256>}, {pipeline_mode = #tpu.pipeline_mode<synchronous>, transform_indices = @transform_1, window_bounds = array<i64: 3, 16, 16>}, {pipeline_mode = #tpu.pipeline_mode<synchronous>, transform_indices = @transform_2, window_bounds = array<i64: 16, 1>}, {transform_indices = @transform_3, window_bounds = array<i64: 1, 16, 128>}]} {
    %c128_i32 = arith.constant 128 : i32
    %0 = arith.muli %arg1, %c128_i32 : i32
    %1 = tpu.assume_multiple %0, 128 : i32
    %cst = arith.constant 0.000000e+00 : f32
    %2 = vector.broadcast %cst : f32 to vector<16x128xf32>
    %c0 = arith.constant 0 : index
    %c0_0 = arith.constant 0 : index
    %c0_1 = arith.constant 0 : index
    %3 = arith.index_cast %1 : i32 to index
    %4 = vector.load %arg2[%c0, %c0_0, %c0_1, %3] : memref<1x1x16x256xbf16, #tpu.memory_space<vmem>>, vector<1x1x16x256xbf16>
    %5 = vector.shape_cast %4 : vector<1x1x16x256xbf16> to vector<16x256xbf16>
    %6 = vector.extract_strided_slice %5 {offsets = [0, 0], sizes = [16, 128], strides = [1, 1]} : vector<16x256xbf16> to vector<16x128xbf16>
    %c0_2 = arith.constant 0 : index
    %c0_3 = arith.constant 0 : index
    %c0_4 = arith.constant 0 : index
    %7 = vector.load %arg3[%c0_2, %c0_3, %c0_4] : memref<3x16x16xbf16, #tpu.memory_space<vmem>>, vector<1x16x16xbf16>
    %8 = vector.shape_cast %7 : vector<1x16x16xbf16> to vector<16x16xbf16>
    %cst_5 = arith.constant dense<0.000000e+00> : vector<16x128xf32>
    %9 = tpu.matmul %8, %6, %cst_5 {dimension_numbers = #tpu.dot_dimension_numbers<[1], [0], [0], [1], [0, 0, 1, 1], [], []>} : vector<16x16xbf16>, vector<16x128xbf16>, vector<16x128xf32> -> vector<16x128xf32>
    %10 = arith.addf %2, %9 : vector<16x128xf32>
    %11 = vector.extract_strided_slice %5 {offsets = [0, 1], sizes = [16, 128], strides = [1, 1]} : vector<16x256xbf16> to vector<16x128xbf16>
    %c1 = arith.constant 1 : index
    %c0_6 = arith.constant 0 : index
    %c0_7 = arith.constant 0 : index
    %12 = vector.load %arg3[%c1, %c0_6, %c0_7] : memref<3x16x16xbf16, #tpu.memory_space<vmem>>, vector<1x16x16xbf16>
    %13 = vector.shape_cast %12 : vector<1x16x16xbf16> to vector<16x16xbf16>
    %cst_8 = arith.constant dense<0.000000e+00> : vector<16x128xf32>
    %14 = tpu.matmul %13, %11, %cst_8 {dimension_numbers = #tpu.dot_dimension_numbers<[1], [0], [0], [1], [0, 0, 1, 1], [], []>} : vector<16x16xbf16>, vector<16x128xbf16>, vector<16x128xf32> -> vector<16x128xf32>
    %15 = arith.addf %10, %14 : vector<16x128xf32>
    %16 = vector.extract_strided_slice %5 {offsets = [0, 2], sizes = [16, 128], strides = [1, 1]} : vector<16x256xbf16> to vector<16x128xbf16>
    %c2 = arith.constant 2 : index
    %c0_9 = arith.constant 0 : index
    %c0_10 = arith.constant 0 : index
    %17 = vector.load %arg3[%c2, %c0_9, %c0_10] : memref<3x16x16xbf16, #tpu.memory_space<vmem>>, vector<1x16x16xbf16>
    %18 = vector.shape_cast %17 : vector<1x16x16xbf16> to vector<16x16xbf16>
    %cst_11 = arith.constant dense<0.000000e+00> : vector<16x128xf32>
    %19 = tpu.matmul %18, %16, %cst_11 {dimension_numbers = #tpu.dot_dimension_numbers<[1], [0], [0], [1], [0, 0, 1, 1], [], []>} : vector<16x16xbf16>, vector<16x128xbf16>, vector<16x128xf32> -> vector<16x128xf32>
    %20 = arith.addf %15, %19 : vector<16x128xf32>
    %c0_12 = arith.constant 0 : index
    %c0_13 = arith.constant 0 : index
    %21 = vector.load %arg4[%c0_12, %c0_13] : memref<16x1xf32, #tpu.memory_space<vmem>>, vector<16x1xf32>
    %22 = vector.broadcast %21 : vector<16x1xf32> to vector<16x128xf32>
    %23 = arith.addf %20, %22 : vector<16x128xf32>
    %cst_14 = arith.constant 0.000000e+00 : f32
    %24 = vector.broadcast %cst_14 : f32 to vector<16x128xf32>
    %25 = arith.subf %24, %23 : vector<16x128xf32>
    %26 = math.exp %25 : vector<16x128xf32>
    %cst_15 = arith.constant 1.000000e+00 : f32
    %27 = vector.broadcast %cst_15 : f32 to vector<16x128xf32>
    %28 = arith.addf %27, %26 : vector<16x128xf32>
    %29 = tpu.reciprocal %28 {approx = true} : vector<16x128xf32> -> vector<16x128xf32>
    %30 = arith.mulf %23, %29 : vector<16x128xf32>
    %c0_16 = arith.constant 0 : index
    %c0_17 = arith.constant 0 : index
    %c0_18 = arith.constant 0 : index
    %31 = vector.load %arg5[%c0_16, %c0_17, %c0_18] : memref<1x16x128xf32, #tpu.memory_space<vmem>>, vector<1x16x128xf32>
    %32 = vector.shape_cast %31 : vector<1x16x128xf32> to vector<16x128xf32>
    %33 = vector.shape_cast %30 : vector<16x128xf32> to vector<1x16x128xf32>
    tpu.vector_store %arg5[%c0_16, %c0_17, %c0_18], %33 {strides = array<i32>} : memref<1x16x128xf32, #tpu.memory_space<vmem>>, vector<1x16x128xf32>,
    return
  }
  func.func @transform_0(%arg0: i32, %arg1: i32) -> (i32, i32, i32, i32) {
    %c0_i32 = arith.constant 0 : i32
    %c0_i32_0 = arith.constant 0 : i32
    %c0_i32_1 = arith.constant 0 : i32
    %c0_i32_2 = arith.constant 0 : i32
    return %arg0, %c0_i32, %c0_i32_0, %c0_i32_1 : i32, i32, i32, i32
  }
  func.func @transform_1(%arg0: i32, %arg1: i32) -> (i32, i32, i32) {
    %c0_i32 = arith.constant 0 : i32
    %c0_i32_0 = arith.constant 0 : i32
    %c0_i32_1 = arith.constant 0 : i32
    %c0_i32_2 = arith.constant 0 : i32
    return %c0_i32, %c0_i32_0, %c0_i32_1 : i32, i32, i32
  }
  func.func @transform_2(%arg0: i32, %arg1: i32) -> (i32, i32) {
    %c0_i32 = arith.constant 0 : i32
    %c0_i32_0 = arith.constant 0 : i32
    %c0_i32_1 = arith.constant 0 : i32
    return %c0_i32, %c0_i32_0 : i32, i32
  }
  func.func @transform_3(%arg0: i32, %arg1: i32) -> (i32, i32, i32) {
    %c0_i32 = arith.constant 0 : i32
    %c0_i32_0 = arith.constant 0 : i32
    return %arg0, %c0_i32, %arg1 : i32, i32, i32
  }
}

</mosaic_0001>

<llo_original>
// kernel: tpu_custom_call.1
$region0: #{tpu_custom_call.1}
  #allocation0 [shape = 'u32[]', space=smem, size = 0x4, offset = 0x4, fixed_abs, tag = 'smem constant byte address 0x4 - core index']
  #allocation1 [shape = 'u32[144,128]{1,0:T(1,128)}', space=vmem, size = 0x12000, scoped, tag = 'internal scratch']
  %s0 = inlined_call_operand.hbm [shape: bf16[2,1,16,256], index: 0, kind: input, shape index: {}]
  %s1 = inlined_call_operand.hbm [shape: bf16[3,16,16], index: 1, kind: input, shape index: {}]
  %s2 = inlined_call_operand.vmem [shape: f32[16,1], index: 2, kind: input, shape index: {}]
  %s3 = inlined_call_operand.hbm [shape: f32[2,16,128], index: 3, kind: output, shape index: {}]
  %s4 = sld [smem:[#allocation0]]
  $region53: #{tpu_custom_call.1} parent=0
    _
  %s6 = ssub.s32 1, %s4
  %s7 = scalar_select 0, %s6, %s4
  $region1: #{tpu_custom_call.1} parent=0
    #allocation2 [shape = 'u8[16384]{0}', space=vmem, size = 0x4000, scoped, tag = 'input window, operand 0']
    #allocation3 [shape = 's32[2]{0}', space=sflag, size = 0x8, scoped, tag = 'scoped memory for tpu_custom_call.1']
    #allocation4 [shape = 's32[2]{0}', space=sflag, size = 0x8, scoped, tag = 'scoped memory for tpu_custom_call.1']
    #allocation5 [shape = 'u8[12288]{0}', space=vmem, size = 0x3000, scoped, tag = 'input window, operand 1, single buffered']
    #allocation6 [shape = 's32[1]{0}', space=sflag, size = 0x4, scoped, tag = 'scoped memory for tpu_custom_call.1']
    #allocation7 [shape = 'u8[16384]{0}', space=vmem, size = 0x4000, scoped, tag = 'output window, operand 0']
    %8 = vsyncpa [#allocation3], 0
    %s9 = scalar_lea.sflag [#allocation3], 1
    %10 = vsyncpa %s9, 0
    %11 = vsyncpa [#allocation6], 0
    %12 = vsyncpa [#allocation4], 0
    %s13 = scalar_lea.sflag [#allocation4], 1
    %14 = vsyncpa %s13, 0
    loop: start=0, step=1, limit=4
    $region2: #{tpu_custom_call.1} parent=1 // loop_pre_header
      _
    $region3: #{tpu_custom_call.1} parent=1 // loop_header
      %s16 = sphi 0, %s20
      %p17 = scmp.ge.s32.totalorder %s16, 4
      %s23 = sphi 0, %s35
      %s24 = sphi 0, %s31
      %s25 = sphi 0, %s23
      %s26 = sphi 0, %s24
      %s27 = sphi 0, %s25
      %s28 = sphi 0, %s26
      %s38 = sphi 0, %s40
      %s41 = sphi 0, %s38
      %s42 = sphi 0, %s41
      %s58 = sphi 0, %s42
      %s62 = sphi 0, %s62
      %s64 = sphi 0, %s62
      %s65 = sphi 0, %s64
      %s79 = sphi 0, %s65
      %s83 = sphi 0, %s83
      %s85 = sphi 0, %s83
      %s86 = sphi 0, %s85
      %s100 = sphi 0, %s86
      %s108 = sphi 0, %s110
      %s111 = sphi 0, %s108
      %s112 = sphi 0, %s111
      %s128 = sphi 0, %s112
    $region4: #{tpu_custom_call.1} parent=1 // loop_header_branch
      %19 = sbr.rel (%p17) target = $region8
    $region5: #{tpu_custom_call.1} parent=1 // loop_body
      %s21 = ssub.s32 %s16, 1
      %s22 = ssub.s32 %s16, 2
      %s29 = sadd.s32 1, %s24
      %p30 = scmp.ge.s32.totalorder %s29, 1
      %s31 = scalar_select %p30, 0, %s29
      %s32 = sadd.s32 1, %s23
      %s33 = scalar_select %p30, %s32, %s23
      %p34 = scmp.ge.s32.totalorder %s33, 2
      %s35 = scalar_select %p34, 0, %s33
      %s36 = ssub.s32 %s23, %s35
      %p37 = scmp.eq.s32.totalorder %s36, 0
      %s39 = sadd.s32 %s38, 1
      %s40 = scalar_select %p37, %s38, %s39
      %p43 = pneg %p37
      %p44 = scmp.eq.s32.totalorder %s16, 1
      %p45 = por %p43, %p44
      %p46 = scmp.ne.s32.totalorder %s38, %s41
      %p47 = scmp.eq.s32.totalorder %s16, 0
      %p48 = por %p46, %p47
      %p49 = scmp.ne.s32.totalorder %s38, %s41
      %p50 = scmp.eq.s32.totalorder %s21, 1
      %p51 = por %p49, %p50
      %p52 = scmp.ne.s32.totalorder %s41, %s42
      %p53 = scmp.eq.s32.totalorder %s21, 0
      %p54 = por %p52, %p53
      %p55 = scmp.ne.s32.totalorder %s41, %s42
      %p56 = scmp.eq.s32.totalorder %s22, 1
      %p57 = por %p55, %p56
      %p59 = scmp.ne.s32.totalorder %s42, %s58
      %p60 = scmp.eq.s32.totalorder %s22, 0
      %p61 = por %p59, %p60
      %s63 = sadd.s32 %s62, 1
      %p66 = scmp.eq.s32.totalorder %s16, 1
      %p67 = scmp.ne.s32.totalorder %s62, %s64
      %p68 = scmp.eq.s32.totalorder %s16, 0
      %p69 = por %p67, %p68
      %p70 = scmp.ne.s32.totalorder %s62, %s64
      %p71 = scmp.eq.s32.totalorder %s21, 1
      %p72 = por %p70, %p71
      %p73 = scmp.ne.s32.totalorder %s64, %s65
      %p74 = scmp.eq.s32.totalorder %s21, 0
      %p75 = por %p73, %p74
      %p76 = scmp.ne.s32.totalorder %s64, %s65
      %p77 = scmp.eq.s32.totalorder %s22, 1
      %p78 = por %p76, %p77
      %p80 = scmp.ne.s32.totalorder %s65, %s79
      %p81 = scmp.eq.s32.totalorder %s22, 0
      %p82 = por %p80, %p81
      %s84 = sadd.s32 %s83, 1
      %p87 = scmp.eq.s32.totalorder %s16, 1
      %p88 = scmp.ne.s32.totalorder %s83, %s85
      %p89 = scmp.eq.s32.totalorder %s16, 0
      %p90 = por %p88, %p89
      %p91 = scmp.ne.s32.totalorder %s83, %s85
      %p92 = scmp.eq.s32.totalorder %s21, 1
      %p93 = por %p91, %p92
      %p94 = scmp.ne.s32.totalorder %s85, %s86
      %p95 = scmp.eq.s32.totalorder %s21, 0
      %p96 = por %p94, %p95
      %p97 = scmp.ne.s32.totalorder %s85, %s86
      %p98 = scmp.eq.s32.totalorder %s22, 1
      %p99 = por %p97, %p98
      %p101 = scmp.ne.s32.totalorder %s86, %s100
      %p102 = scmp.eq.s32.totalorder %s22, 0
      %p103 = por %p101, %p102
      %s104 = ssub.s32 %s23, %s35
      %s105 = ssub.s32 %s24, %s31
      %s106 = sor.u32 %s104, %s105
      %p107 = scmp.eq.s32.totalorder %s106, 0
      %s109 = sadd.s32 %s108, 1
      %s110 = scalar_select %p107, %s108, %s109
      %p113 = pneg %p107
      %p114 = scmp.eq.s32.totalorder %s16, 1
      %p115 = por %p113, %p114
      %p116 = scmp.ne.s32.totalorder %s108, %s111
      %p117 = scmp.eq.s32.totalorder %s16, 0
      %p118 = por %p116, %p117
      %p119 = scmp.ne.s32.totalorder %s108, %s111
      %p120 = scmp.eq.s32.totalorder %s21, 1
      %p121 = por %p119, %p120
      %p122 = scmp.ne.s32.totalorder %s111, %s112
      %p123 = scmp.eq.s32.totalorder %s21, 0
      %p124 = por %p122, %p123
      %p125 = scmp.ne.s32.totalorder %s111, %s112
      %p126 = scmp.eq.s32.totalorder %s22, 1
      %p127 = por %p125, %p126
      %p129 = scmp.ne.s32.totalorder %s112, %s128
      %p130 = scmp.eq.s32.totalorder %s22, 0
      %p131 = por %p129, %p130
      %p132 = scmp.le.s32.totalorder 1, %s16
      %p133 = scmp.lt.s32.totalorder %s16, 3
      %p134 = pnand %p132, %p133
      %p135 = pneg %p134
      // Predicated region
      $region9: #{tpu_custom_call.1} parent=5 // pred_check
        _
      $region10: #{tpu_custom_call.1} parent=5 // pred_check_branch
        %137 = sbr.rel (%p134) target = $region12
      $region11: #{tpu_custom_call.1} parent=5 // pred_region
        %s138 = ssub.s32 %s16, 1
        // Predicated region
        $region13: #{tpu_custom_call.1} parent=11 // pred_check
          %p139 = pneg %p75
        $region14: #{tpu_custom_call.1} parent=11 // pred_check_branch
          %141 = sbr.rel (%p139) target = $region16
        $region15: #{tpu_custom_call.1} parent=11 // pred_region
          %s143 = ssub.s32 384, 384
          %144 = vsyncadd [#allocation6], %s143
          %s145 = sshll.u32 [#allocation5], 4
          %s146 = int_to_ptr.vmem [resolvable:$true] %s145
          %151 = dma.hbm_to_vmem [thread:$0]  %s1, 384, %s146, [#allocation6], 64, 64, 4
        $region16: #{tpu_custom_call.1} parent=11 // pred_fallthru
          _
        // Predicated region
        $region17: #{tpu_custom_call.1} parent=11 // pred_check
          %p152 = pneg %p96
        $region18: #{tpu_custom_call.1} parent=11 // pred_check_branch
          %154 = sbr.rel (%p152) target = $region20
        $region19: #{tpu_custom_call.1} parent=11 // pred_region
          _
        $region20: #{tpu_custom_call.1} parent=11 // pred_fallthru
          _
      $region12: #{tpu_custom_call.1} parent=5 // pred_fallthru
        _
      %p155 = scmp.lt.s32.totalorder %s16, 2
      // Predicated region
      $region21: #{tpu_custom_call.1} parent=5 // pred_check
        %p156 = pneg %p155
      $region22: #{tpu_custom_call.1} parent=5 // pred_check_branch
        %158 = sbr.rel (%p156) target = $region24
      $region23: #{tpu_custom_call.1} parent=5 // pred_region
        // Predicated region
        $region25: #{tpu_custom_call.1} parent=23 // pred_check
          %p159 = pneg %p48
        $region26: #{tpu_custom_call.1} parent=23 // pred_check_branch
          %161 = sbr.rel (%p159) target = $region28
        $region27: #{tpu_custom_call.1} parent=23 // pred_region
          %s162 = sand.u32 %s38, 1
          %s163 = scalar_lea.sflag [#allocation3], %s162
          %s164 = sand.u32 %s38, 1
          %s165 = smul.addr %s164, 16
          %s166 = scalar_lea.vmem [#allocation2], %s165
          %s168 = ssub.s32 256, 256
          %169 = vsyncadd %s163, %s168
          %s170 = smul.addr %s23, 4
          %s171 = smul.addr %s170, 64
          %s172 = scalar_lea.hbm %s0, %s171
          %s173 = sshll.u32 %s166, 4
          %s174 = int_to_ptr.vmem [resolvable:$true] %s173
          %179 = dma.hbm_to_vmem [thread:$0]  %s172, 256, %s174, %s163, 128, 128, 8
        $region28: #{tpu_custom_call.1} parent=23 // pred_fallthru
          _
      $region24: #{tpu_custom_call.1} parent=5 // pred_fallthru
        _
      %p180 = scmp.le.s32.totalorder 1, %s16
      %p181 = scmp.lt.s32.totalorder %s16, 3
      %p182 = pnand %p180, %p181
      %p183 = pneg %p182
      // Predicated region
      $region29: #{tpu_custom_call.1} parent=5 // pred_check
        _
      $region30: #{tpu_custom_call.1} parent=5 // pred_check_branch
        %185 = sbr.rel (%p182) target = $region32
      $region31: #{tpu_custom_call.1} parent=5 // pred_region
        %s186 = ssub.s32 %s16, 1
        %s187 = sand.u32 %s41, 1
        %s188 = scalar_lea.sflag [#allocation3], %s187
        %s189 = sand.u32 %s41, 1
        %s190 = smul.addr %s189, 16
        %s191 = scalar_lea.vmem [#allocation2], %s190
        // Predicated region
        $region33: #{tpu_custom_call.1} parent=31 // pred_check
          %p192 = pneg %p54
        $region34: #{tpu_custom_call.1} parent=31 // pred_check_branch
          %194 = sbr.rel (%p192) target = $region36
        $region35: #{tpu_custom_call.1} parent=31 // pred_region
          %195 = dma.done %s188, 256
        $region36: #{tpu_custom_call.1} parent=31 // pred_fallthru
          _
        // Predicated region
        $region37: #{tpu_custom_call.1} parent=31 // pred_check
          %p196 = pneg %p75
        $region38: #{tpu_custom_call.1} parent=31 // pred_check_branch
          %198 = sbr.rel (%p196) target = $region40
        $region39: #{tpu_custom_call.1} parent=31 // pred_region
          %199 = dma.done [#allocation6], 384
        $region40: #{tpu_custom_call.1} parent=31 // pred_fallthru
          _
        %s200 = sand.u32 %s41, 1
        %s201 = scalar_lea.sflag [#allocation3], %s200
        %s202 = sand.u32 %s41, 1
        %s203 = smul.addr %s202, 16
        %s204 = scalar_lea.vmem [#allocation2], %s203
        %p205 = pneg %p54
        %p206 = pneg %p51
        %p207 = pneg %p75
        %p208 = pneg %p72
        %p209 = pneg %p96
        %p210 = pneg %p93
        %p211 = pneg %p124
        %p212 = pneg %p121
        %s213 = sand.u32 %s111, 1
        %s214 = scalar_lea.sflag [#allocation4], %s213
        %s215 = sand.u32 %s111, 1
        %s216 = smul.addr %s215, 16
        %s217 = scalar_lea.vmem [#allocation7], %s216
        %s219 = smul.u32 %s26, 128
        %s220 = sshra.s32 %s219, 7
        %s221 = sand.u32 %s219, 127
        %s222 = smul.addr %s220, 4
        %s223 = scalar_lea.vmem %s191, %s222 [#allocation2]
        %v224 = vld [vmem:[%s223] sm:$0xff]
        %v225 = vld [vmem:[%s223 + $0x8] sm:$0xff]
        %v226 = vld [vmem:[#allocation5] sm:$0xf]
        %v227 = vld [vmem:[#allocation5 + $0x4] sm:$0xf]
        %s228 = scalar_lea.vmem [#allocation5], 8
        %v229 = vld [vmem:[%s228] sm:$0xf]
        %v230 = vld [vmem:[%s228 + $0x4] sm:$0xf]
        %v233 = vunpack.c.l.b16 %v229
        %v234 = vunpack.c.l.b16 %v230
        %v235 = vpack.c.b16 %v234, %v233
        %v238 = vunpack.c.l.b16 %v224
        %v239 = vunpack.c.h.b16 %v224
        %v240 = vunpack.c.l.b16 %v225
        %v241 = vunpack.c.h.b16 %v225
        %v242 = vpack.c.b16 %v240, %v238
        %v243 = vpack.c.b16 %v241, %v239
        %244 = vrot.lane.b32.xlu0 %v242, 127
        %v245 = vpop.permute.xlu0 %244
        %246 = vrot.lane.b32.xlu0 %v243, 127
        %v247 = vpop.permute.xlu0 %246
        %vm248 = vcmask 1039360
        %v249 = vsel %vm248, %v245, %v247
        %vm251 = vcmask 130048
        %v253 = vsel %vm251, %v235, 0
        %255 = vmatprep.subr.bf16.mxu0 0
        %256 = vmatpush1.bf16.msra.mxu0 0
        %257 = vmatprep.subr.bf16.mxu0 0
        %258 = vmatpush1.bf16.msra.mxu0 0
        %259 = vmatprep.subr.bf16.mxu0 0
        %260 = vmatpush1.bf16.msra.mxu0 0
        %261 = vmatprep.subr.bf16.mxu0 0
        %262 = vmatpush1.bf16.msra.mxu0 0
        %263 = vmatprep.subr.bf16.mxu0 0
        %264 = vmatpush1.bf16.msra.mxu0 0
        %265 = vmatprep.subr.bf16.mxu0 0
        %266 = vmatpush1.bf16.msra.mxu0 0
        %267 = vmatprep.subr.bf16.mxu0 0
        %268 = vmatpush1.bf16.msra.mxu0 0
        %269 = vmatprep.subr.bf16.mxu0 0
        %270 = vmatpush1.bf16.msra.mxu0 %v249
        %271 = vmatprep.subr.bf16.mxu0 0
        %272 = vmatpush2.bf16.msra.mxu0 0
        %273 = vmatprep.subr.bf16.mxu0 0
        %274 = vmatpush2.bf16.msra.mxu0 0
        %275 = vmatprep.subr.bf16.mxu0 0
        %276 = vmatpush2.bf16.msra.mxu0 0
        %277 = vmatprep.subr.bf16.mxu0 0
        %278 = vmatpush2.bf16.msra.mxu0 0
        %279 = vmatprep.subr.bf16.mxu0 0
        %280 = vmatpush2.bf16.msra.mxu0 0
        %281 = vmatprep.subr.bf16.mxu0 0
        %282 = vmatpush2.bf16.msra.mxu0 0
        %283 = vmatprep.subr.bf16.mxu0 0
        %284 = vmatpush2.bf16.msra.mxu0 0
        %285 = vmatprep.subr.bf16.mxu0 0
        %286 = vmatpush2.bf16.msra.mxu0 0
        %287 = vmatprep.mubr.bf16.mxu0 0
        %288 = vmatmul.mubr.bf16.gmra.mxu0 %v253
        %v289 = vpop.f32.mrf.mxu0
        %v290 = vadd.f32 0.0, %v289
        %v291 = vpop.f32.mrf.mxu0
        %v292 = vpop.f32.mrf.mxu0
        %v293 = vadd.f32 0.0, %v292
        %v294 = vpop.f32.mrf.mxu0
        %295 = vdwg.mxu0
        %v298 = vunpack.c.l.b16 %v226
        %v299 = vunpack.c.l.b16 %v227
        %v300 = vpack.c.b16 %v299, %v298
        %v303 = vsel %vm251, %v300, 0
        %305 = vmatprep.subr.bf16.mxu0 0
        %306 = vmatpush1.bf16.msra.mxu0 0
        %307 = vmatprep.subr.bf16.mxu0 0
        %308 = vmatpush1.bf16.msra.mxu0 0
        %309 = vmatprep.subr.bf16.mxu0 0
        %310 = vmatpush1.bf16.msra.mxu0 0
        %311 = vmatprep.subr.bf16.mxu0 0
        %312 = vmatpush1.bf16.msra.mxu0 0
        %313 = vmatprep.subr.bf16.mxu0 0
        %314 = vmatpush1.bf16.msra.mxu0 0
        %315 = vmatprep.subr.bf16.mxu0 0
        %316 = vmatpush1.bf16.msra.mxu0 0
        %317 = vmatprep.subr.bf16.mxu0 0
        %318 = vmatpush1.bf16.msra.mxu0 0
        %319 = vmatprep.subr.bf16.mxu0 0
        %320 = vmatpush1.bf16.msra.mxu0 %v242
        %321 = vmatprep.subr.bf16.mxu0 0
        %322 = vmatpush2.bf16.msra.mxu0 0
        %323 = vmatprep.subr.bf16.mxu0 0
        %324 = vmatpush2.bf16.msra.mxu0 0
        %325 = vmatprep.subr.bf16.mxu0 0
        %326 = vmatpush2.bf16.msra.mxu0 0
        %327 = vmatprep.subr.bf16.mxu0 0
        %328 = vmatpush2.bf16.msra.mxu0 0
        %329 = vmatprep.subr.bf16.mxu0 0
        %330 = vmatpush2.bf16.msra.mxu0 0
        %331 = vmatprep.subr.bf16.mxu0 0
        %332 = vmatpush2.bf16.msra.mxu0 0
        %333 = vmatprep.subr.bf16.mxu0 0
        %334 = vmatpush2.bf16.msra.mxu0 0
        %335 = vmatprep.subr.bf16.mxu0 0
        %336 = vmatpush2.bf16.msra.mxu0 0
        %337 = vmatprep.mubr.bf16.mxu0 0
        %338 = vmatmul.mubr.bf16.gmra.mxu0 %v303
        %v339 = vpop.f32.mrf.mxu0
        %v340 = vadd.f32 %v290, %v339
        %v341 = vpop.f32.mrf.mxu0
        %v342 = vpop.f32.mrf.mxu0
        %v343 = vadd.f32 %v293, %v342
        %v344 = vpop.f32.mrf.mxu0
        %345 = vdwg.mxu0
        %s346 = scalar_lea.vmem [#allocation5], 16
        %v347 = vld [vmem:[%s346] sm:$0xf]
        %v348 = vld [vmem:[%s346 + $0x4] sm:$0xf]
        %v351 = vunpack.c.l.b16 %v347
        %v352 = vunpack.c.l.b16 %v348
        %v353 = vpack.c.b16 %v352, %v351
        %354 = vrot.lane.b32.xlu0 %v242, 126
        %v355 = vpop.permute.xlu0 %354
        %356 = vrot.lane.b32.xlu0 %v243, 126
        %v357 = vpop.permute.xlu0 %356
        %vm358 = vcmask 1031168
        %v359 = vsel %vm358, %v355, %v357
        %v362 = vsel %vm251, %v353, 0
        %364 = vmatprep.subr.bf16.mxu0 0
        %365 = vmatpush1.bf16.msra.mxu0 0
        %366 = vmatprep.subr.bf16.mxu0 0
        %367 = vmatpush1.bf16.msra.mxu0 0
        %368 = vmatprep.subr.bf16.mxu0 0
        %369 = vmatpush1.bf16.msra.mxu0 0
        %370 = vmatprep.subr.bf16.mxu0 0
        %371 = vmatpush1.bf16.msra.mxu0 0
        %372 = vmatprep.subr.bf16.mxu0 0
        %373 = vmatpush1.bf16.msra.mxu0 0
        %374 = vmatprep.subr.bf16.mxu0 0
        %375 = vmatpush1.bf16.msra.mxu0 0
        %376 = vmatprep.subr.bf16.mxu0 0
        %377 = vmatpush1.bf16.msra.mxu0 0
        %378 = vmatprep.subr.bf16.mxu0 0
        %379 = vmatpush1.bf16.msra.mxu0 %v359
        %380 = vmatprep.subr.bf16.mxu0 0
        %381 = vmatpush2.bf16.msra.mxu0 0
        %382 = vmatprep.subr.bf16.mxu0 0
        %383 = vmatpush2.bf16.msra.mxu0 0
        %384 = vmatprep.subr.bf16.mxu0 0
        %385 = vmatpush2.bf16.msra.mxu0 0
        %386 = vmatprep.subr.bf16.mxu0 0
        %387 = vmatpush2.bf16.msra.mxu0 0
        %388 = vmatprep.subr.bf16.mxu0 0
        %389 = vmatpush2.bf16.msra.mxu0 0
        %390 = vmatprep.subr.bf16.mxu0 0
        %391 = vmatpush2.bf16.msra.mxu0 0
        %392 = vmatprep.subr.bf16.mxu0 0
        %393 = vmatpush2.bf16.msra.mxu0 0
        %394 = vmatprep.subr.bf16.mxu0 0
        %395 = vmatpush2.bf16.msra.mxu0 0
        %396 = vmatprep.mubr.bf16.mxu0 0
        %397 = vmatmul.mubr.bf16.gmra.mxu0 %v362
        %v398 = vpop.f32.mrf.mxu0
        %v399 = vadd.f32 0.0, %v398
        %v400 = vpop.f32.mrf.mxu0
        %v401 = vpop.f32.mrf.mxu0
        %v402 = vadd.f32 0.0, %v401
        %v403 = vpop.f32.mrf.mxu0
        %404 = vdwg.mxu0
        %v405 = vadd.f32 %v340, %v399
        %v406 = vadd.f32 %v343, %v402
        %v407 = vld [vmem:[%s2] sm:$0xff]
        %v408 = vld [vmem:[%s2 + $0x8] sm:$0xff]
        %410 = vset.pattern.permute.xlu0 0
        %411 = vperm.xlu0 %410, %v407
        %v412 = vpop.permute.xlu0 %411
        %415 = vset.pattern.permute.xlu0 0
        %416 = vperm.xlu0 %415, %v408
        %v417 = vpop.permute.xlu0 %416
        %v419 = vadd.f32 %v405, %v412
        %v420 = vadd.f32 %v406, %v417
        %v421 = vsub.f32 0.0, %v419
        %v422 = vsub.f32 0.0, %v420
        %v423 = vmul.f32 %v421, 1.442695
        %v424 = vpow.pop %v423
        %v425 = vmul.f32 %v422, 1.442695
        %v426 = vpow.pop %v425
        %v427 = vadd.f32 %v424, 1.0
        %v428 = vadd.f32 %v426, 1.0
        %v429 = vrcp.pop %v427
        %v430 = vrcp.pop %v428
        %v431 = vmul.f32 %v419, %v429
        %v432 = vmul.f32 %v420, %v430
        %433 = vst [vmem:[%s217] sm:$0xff] %v431
        %434 = vst [vmem:[%s217 + $0x8] sm:$0xff] %v432
        %s435 = sand.u32 %s111, 1
        %s436 = scalar_lea.sflag [#allocation4], %s435
        %s437 = sand.u32 %s111, 1
        %s438 = smul.addr %s437, 16
        %s439 = scalar_lea.vmem [#allocation7], %s438
        // Predicated region
        $region41: #{tpu_custom_call.1} parent=31 // pred_check
          %p440 = pneg %p121
        $region42: #{tpu_custom_call.1} parent=31 // pred_check_branch
          %442 = sbr.rel (%p440) target = $region44
        $region43: #{tpu_custom_call.1} parent=31 // pred_region
          %s444 = ssub.s32 256, 256
          %445 = vsyncadd %s436, %s444
          %s446 = smul.addr %s25, 2
          %s447 = sadd.s32 %s26, %s446
          %s448 = smul.addr %s447, 128
          %s449 = scalar_lea.hbm %s3, %s448
          %s450 = sshll.u32 %s439, 4
          %s451 = int_to_ptr.vmem [resolvable:$true] %s450
          %456 = dma.vmem_to_hbm [thread:$0]  %s451, 256, %s449, %s436, 128, 128, 8
        $region44: #{tpu_custom_call.1} parent=31 // pred_fallthru
          _
      $region32: #{tpu_custom_call.1} parent=5 // pred_fallthru
        _
      %p457 = scmp.le.s32.totalorder 2, %s16
      // Predicated region
      $region45: #{tpu_custom_call.1} parent=5 // pred_check
        %p458 = pneg %p457
      $region46: #{tpu_custom_call.1} parent=5 // pred_check_branch
        %460 = sbr.rel (%p458) target = $region48
      $region47: #{tpu_custom_call.1} parent=5 // pred_region
        %s461 = ssub.s32 %s16, 2
        // Predicated region
        $region49: #{tpu_custom_call.1} parent=47 // pred_check
          %p462 = pneg %p127
        $region50: #{tpu_custom_call.1} parent=47 // pred_check_branch
          %464 = sbr.rel (%p462) target = $region52
        $region51: #{tpu_custom_call.1} parent=47 // pred_region
          %s465 = sand.u32 %s112, 1
          %s466 = scalar_lea.sflag [#allocation4], %s465
          %s467 = sand.u32 %s112, 1
          %s468 = smul.addr %s467, 16
          %s469 = scalar_lea.vmem [#allocation7], %s468
          %470 = dma.done %s466, 256
        $region52: #{tpu_custom_call.1} parent=47 // pred_fallthru
          _
      $region48: #{tpu_custom_call.1} parent=5 // pred_fallthru
        _
    $region6: #{tpu_custom_call.1} parent=1 // loop_footer
      %s20 = sadd.s32 1, %s16
    $region7: #{tpu_custom_call.1} parent=1 // loop_footer_branch
      %15 = sbr.rel target = $region3
    $region8: #{tpu_custom_call.1} parent=1 // loop_exit
      _
    %471 = vsyncpa [#allocation3], 1
    %s472 = scalar_lea.sflag [#allocation3], 1
    %473 = vsyncpa %s472, 1
    %474 = vsyncpa [#allocation6], 1
    %475 = vsyncpa [#allocation4], 1
    %s476 = scalar_lea.sflag [#allocation4], 1
    %477 = vsyncpa %s476, 1

</llo_original>
